<compile_context>
chip_gen: v5e
topology: v5e:2x2
jax: 0.10.0
libtpu: 0.0.40
codegen_flags: <defaults>
</compile_context>

<pallas_src>
import functools

import jax
import jax.numpy as jnp
from jax.experimental import pallas as pl
from jax.experimental.pallas import tpu as pltpu


# ---------------------------------------------------------------------------
# Tile selection (per-generation VMEM aware)
# ---------------------------------------------------------------------------
def _vmem_capacity_bytes():
    try:
        return int(pltpu.get_tpu_info().vmem_capacity_bytes)
    except Exception:  # conservative fallback (v7x per-core size)
        return 64 << 20


def _pick_tiles(B, N, D, itemsize, cap):
    # Per-buffer budget ~16 MiB on every generation: cap//4 on 64 MiB VMEM
    # (v7x), cap//8 on 128 MiB VMEM (v5e/v6e).  Double-buffered seq + mask +
    # output tiles plus the accumulator then stay well under capacity.
    budget = cap // 4 if cap <= (64 << 20) else cap // 8

    if B % 8 == 0:
        m = B // 8
        tb = 8
        # Largest multiple of 8 dividing B that fits the budget with the full
        # node axis, keeping >= 2 batch grid steps when B > 8 so both v7x
        # TensorCores get work.
        for g in range(m, 0, -1):
            if m % g:
                continue
            cand = 8 * g
            if cand * N * D * itemsize > budget:
                continue
            if B > 8 and B // cand < 2:
                continue
            tb = cand
            break
    else:
        # Output block == full batch extent satisfies the (8,128) rule; see
        # header comment for why we do not pad B on a bandwidth-bound kernel.
        tb = B

    if tb * N * D * itemsize <= budget:
        tn = N                                       # whole node axis fits
    else:
        tn = (budget // (tb * D * itemsize)) // 128 * 128
        tn = max(128, min(tn, N))                    # lane-aligned node tile
    return tb, tn


# ---------------------------------------------------------------------------
# Kernels
# ---------------------------------------------------------------------------
def _mean_kernel(seq_ref, out_ref, acc_ref, *, inv_n, n_total, tn, ragged):
    k = pl.program_id(1)
    nk = pl.num_programs(1)

    @pl.when(k == 0)
    def _init():
        acc_ref[...] = jnp.zeros_like(acc_ref)

    def accumulate(tail):
        s = seq_ref[...].astype(jnp.float32)          # (TB, TN, D)
        if tail:
            # Only the last node tile pays the ragged mask; (1, TN, 1) iota.
            node = k * tn + jax.lax.broadcasted_iota(jnp.int32, (1, tn, 1), 1)
            s = jnp.where(node < n_total, s, 0.0)
        acc_ref[...] += jnp.sum(s, axis=1)

    if ragged:
        @pl.when(k < nk - 1)
        def _body():
            accumulate(False)

        @pl.when(k == nk - 1)
        def _tail():
            accumulate(True)
    else:
        accumulate(False)

    @pl.when(k == nk - 1)
    def _finalize():
        out_ref[...] = (acc_ref[...] * inv_n).astype(out_ref.dtype)


def _masked_kernel(seq_ref, msk_ref, inv_ref, out_ref, acc_ref,
                   *, n_total, tn, ragged):
    k = pl.program_id(1)
    nk = pl.num_programs(1)

    @pl.when(k == 0)
    def _init():
        acc_ref[...] = jnp.zeros_like(acc_ref)

    def accumulate(tail):
        s = seq_ref[...].astype(jnp.float32)          # (TB, TN, D)
        m = msk_ref[...]                              # (TB, TN, 1) f32 -> lane splat
        w = s * m
        if tail:
            node = k * tn + jax.lax.broadcasted_iota(jnp.int32, (1, tn, 1), 1)
            w = jnp.where(node < n_total, w, 0.0)     # select: kills OOB garbage
        acc_ref[...] += jnp.sum(w, axis=1)

    if ragged:
        @pl.when(k < nk - 1)
        def _body():
            accumulate(False)

        @pl.when(k == nk - 1)
        def _tail():
            accumulate(True)
    else:
        accumulate(False)

    @pl.when(k == nk - 1)
    def _finalize():
        # Precomputed 1/sum(msk) from SMEM -> single VPU multiply.
        out_ref[...] = (acc_ref[...] * inv_ref[0, 0]).astype(out_ref.dtype)


# ---------------------------------------------------------------------------
# Wrapper (matches AvgReadout.forward)
# ---------------------------------------------------------------------------
def avg_readout(seq, msk=None, *, node_tile=None):
    B, N, D = seq.shape
    itemsize = seq.dtype.itemsize
    cap = _vmem_capacity_bytes()
    tb, tn = _pick_tiles(B, N, D, itemsize, cap)
    if node_tile is not None:                         # test / tuning hook
        assert node_tile >= N or node_tile % 128 == 0
        tn = min(node_tile, N)

    nb = B // tb
    nk = pl.cdiv(N, tn)
    ragged = (N % tn) != 0

    # Actual double-buffered VMEM footprint (seq + mask + out tiles) + f32 acc.
    seq_bytes = tb * tn * D * itemsize
    msk_bytes = (tb * tn * 4) if msk is not None else 0
    out_bytes = tb * D * itemsize
    need = 2 * (seq_bytes + msk_bytes + out_bytes) + tb * D * 4
    vmem_limit = int(min(max(need + need // 4 + (1 << 20), 32 << 20),
                         cap * 3 // 4))
    cparams = pltpu.CompilerParams(
        dimension_semantics=("parallel", "arbitrary"),   # batch | node reduction
        vmem_limit_bytes=vmem_limit,
    )

    out_shape = jax.ShapeDtypeStruct((B, D), seq.dtype)
    seq_spec = pl.BlockSpec((tb, tn, D), lambda i, k: (i, k, 0))
    out_spec = pl.BlockSpec((tb, D), lambda i, k: (i, 0))
    acc_scratch = pltpu.VMEM((tb, D), jnp.float32)

    if msk is None:
        kernel = functools.partial(_mean_kernel, inv_n=1.0 / N, n_total=N,
                                   tn=tn, ragged=ragged)
        return pl.pallas_call(
            kernel,
            out_shape=out_shape,
            grid_spec=pltpu.PrefetchScalarGridSpec(
                num_scalar_prefetch=0,
                grid=(nb, nk),
                in_specs=[seq_spec],
                out_specs=out_spec,
                scratch_shapes=[acc_scratch],
            ),
            compiler_params=cparams,
        )(seq)

    # Mask stays float32 end-to-end; trailing unit dim so the in-kernel
    # broadcast over D is a lane splat (no XLU relayout per tile).
    msk_f32 = msk.astype(jnp.float32)
    inv_denom = (1.0 / jnp.sum(msk_f32)).reshape(1, 1).astype(jnp.float32)
    msk3 = msk_f32.reshape(B, N, 1)

    kernel = functools.partial(_masked_kernel, n_total=N, tn=tn, ragged=ragged)
    return pl.pallas_call(
        kernel,
        out_shape=out_shape,
        grid_spec=pltpu.PrefetchScalarGridSpec(
            num_scalar_prefetch=0,
            grid=(nb, nk),
            in_specs=[
                seq_spec,
                pl.BlockSpec((tb, tn, 1), lambda i, k: (i, k, 0)),
                pl.BlockSpec((1, 1), lambda i, k: (0, 0),
                             memory_space=pltpu.MemorySpace.SMEM),
            ],
            out_specs=out_spec,
            scratch_shapes=[acc_scratch],
        ),
        compiler_params=cparams,
    )(seq, msk3, inv_denom)


# ---------------------------------------------------------------------------
# Pure-JAX reference (exact PyTorch semantics) for verification
# ---------------------------------------------------------------------------
def avg_readout_ref(seq, msk=None):
    if msk is None:
        return jnp.mean(seq, axis=1)
    m = jnp.expand_dims(msk, -1).astype(jnp.float32)
    s = seq.astype(jnp.float32)
    return (jnp.sum(s * m, axis=1) / jnp.sum(m)).astype(seq.dtype)


if __name__ == "__main__":
    key = jax.random.PRNGKey(0)
    k1, k2, k3, k4, k5, k6, k7 = jax.random.split(key, 7)

    # 1) Small shapes matching the module's typical use (tb = B path, tn = N).
    B, N, D = 2, 8, 32
    seq = jax.random.normal(k1, (B, N, D), dtype=jnp.float32)
    msk = (jax.random.uniform(k2, (B, N)) > 0.3).astype(jnp.float32)

    out_mean = jax.block_until_ready(avg_readout(seq, None))
    assert out_mean.shape == (B, D)
    assert jnp.allclose(out_mean, avg_readout_ref(seq, None), atol=1e-5, rtol=1e-5)

    out_msk = jax.block_until_ready(avg_readout(seq, msk))
    assert out_msk.shape == (B, D)
    assert jnp.allclose(out_msk, avg_readout_ref(seq, msk), atol=1e-5, rtol=1e-5)

    # 2) Node-tiled + ragged tail path (gated last-tile masking).
    B2, N2, D2 = 8, 200, 128
    seq2 = jax.random.normal(k3, (B2, N2, D2), dtype=jnp.float32)
    msk2 = (jax.random.uniform(k4, (B2, N2)) > 0.5).astype(jnp.float32)

    out2_mean = jax.block_until_ready(avg_readout(seq2, None, node_tile=128))
    assert jnp.allclose(out2_mean, avg_readout_ref(seq2, None), atol=1e-4, rtol=1e-5)

    out2_msk = jax.block_until_ready(avg_readout(seq2, msk2, node_tile=128))
    assert jnp.allclose(out2_msk, avg_readout_ref(seq2, msk2), atol=1e-4, rtol=1e-5)

    # 3) TB growth path: B=32 -> tb=16, nb=2 (both v7x cores fed).
    B3, N3, D3 = 32, 16, 64
    seq3 = jax.random.normal(k5, (B3, N3, D3), dtype=jnp.float32)
    msk3 = (jax.random.uniform(k6, (B3, N3)) > 0.4).astype(jnp.float32)
    out3 = jax.block_until_ready(avg_readout(seq3, msk3))
    assert jnp.allclose(out3, avg_readout_ref(seq3, msk3), atol=1e-4, rtol=1e-5)

    # 4) bf16 inputs: f32 accumulation, f32 mask kept end-to-end.
    B4, N4, D4 = 8, 40, 128
    seq4 = jax.random.normal(k7, (B4, N4, D4), dtype=jnp.float32).astype(jnp.bfloat16)
    msk4 = (jax.random.uniform(k2, (B4, N4)) > 0.5).astype(jnp.float32)
    out4 = jax.block_until_ready(avg_readout(seq4, msk4))
    ref4 = avg_readout_ref(seq4, msk4).astype(jnp.float32)
    assert jnp.allclose(out4.astype(jnp.float32), ref4, atol=3e-2, rtol=3e-2)

    print("KERNEL_OK")
</pallas_src>

<mosaic_0001>
module attributes {stable_mosaic.version = 11 : i64} {
  func.func @_mean_kernel(%arg0: i32, %arg1: i32, %arg2: memref<2x8x32xf32, #tpu.memory_space<vmem>>, %arg3: memref<2x32xf32, #tpu.memory_space<vmem>>, %arg4: memref<2x32xf32, #tpu.memory_space<vmem>>) attributes {dimension_semantics = [#tpu.dimension_semantics<parallel>, #tpu.dimension_semantics<arbitrary>], iteration_bounds = array<i64: 1, 1>, scalar_prefetch = 0 : i64, scratch_operands = 1 : i64, tpu.core_type = #tpu.core_type<tc>, window_params = [{transform_indices = @transform_0, window_bounds = array<i64: 2, 8, 32>}, {transform_indices = @transform_1, window_bounds = array<i64: 2, 32>}]} {
    %c0_i32 = arith.constant 0 : i32
    %0 = arith.cmpi eq, %arg1, %c0_i32 : i32
    %1 = arith.extui %0 : i1 to i32
    %c0_i32_0 = arith.constant 0 : i32
    %2 = arith.cmpi ne, %1, %c0_i32_0 : i32
    scf.if %2 {
      %cst_9 = arith.constant 0.000000e+00 : f32
      %11 = vector.broadcast %cst_9 : f32 to vector<2x32xf32>
      %c0_10 = arith.constant 0 : index
      %c0_11 = arith.constant 0 : index
      %12 = vector.load %arg4[%c0_10, %c0_11] : memref<2x32xf32, #tpu.memory_space<vmem>>, vector<2x32xf32>
      tpu.vector_store %arg4[%c0_10, %c0_11], %11 {strides = array<i32>} : memref<2x32xf32, #tpu.memory_space<vmem>>, vector<2x32xf32>,
    } else {
    }
    %c0 = arith.constant 0 : index
    %c0_1 = arith.constant 0 : index
    %c0_2 = arith.constant 0 : index
    %3 = vector.load %arg2[%c0, %c0_1, %c0_2] : memref<2x8x32xf32, #tpu.memory_space<vmem>>, vector<2x8x32xf32>
    %c0_3 = arith.constant 0 : index
    %c0_4 = arith.constant 0 : index
    %4 = vector.load %arg4[%c0_3, %c0_4] : memref<2x32xf32, #tpu.memory_space<vmem>>, vector<2x32xf32>
    %cst = arith.constant dense<0.000000e+00> : vector<2x32xf32>
    %5 = vector.multi_reduction <add>, %3, %cst [1] : vector<2x8x32xf32> to vector<2x32xf32>
    %6 = arith.addf %4, %5 : vector<2x32xf32>
    %c0_5 = arith.constant 0 : index
    %c0_6 = arith.constant 0 : index
    %7 = vector.load %arg4[%c0_5, %c0_6] : memref<2x32xf32, #tpu.memory_space<vmem>>, vector<2x32xf32>
    tpu.vector_store %arg4[%c0_5, %c0_6], %6 {strides = array<i32>} : memref<2x32xf32, #tpu.memory_space<vmem>>, vector<2x32xf32>,
    %c0_i32_7 = arith.constant 0 : i32
    %8 = arith.cmpi eq, %arg1, %c0_i32_7 : i32
    %9 = arith.extui %8 : i1 to i32
    %c0_i32_8 = arith.constant 0 : i32
    %10 = arith.cmpi ne, %9, %c0_i32_8 : i32
    scf.if %10 {
      %c0_9 = arith.constant 0 : index
      %c0_10 = arith.constant 0 : index
      %11 = vector.load %arg4[%c0_9, %c0_10] : memref<2x32xf32, #tpu.memory_space<vmem>>, vector<2x32xf32>
      %cst_11 = arith.constant 1.250000e-01 : f32
      %12 = vector.broadcast %cst_11 : f32 to vector<2x32xf32>
      %13 = arith.mulf %11, %12 : vector<2x32xf32>
      %c0_12 = arith.constant 0 : index
      %c0_13 = arith.constant 0 : index
      %14 = vector.load %arg3[%c0_12, %c0_13] : memref<2x32xf32, #tpu.memory_space<vmem>>, vector<2x32xf32>
      tpu.vector_store %arg3[%c0_12, %c0_13], %13 {strides = array<i32>} : memref<2x32xf32, #tpu.memory_space<vmem>>, vector<2x32xf32>,
    } else {
    }
    return
  }
  func.func @transform_0(%arg0: i32, %arg1: i32) -> (i32, i32, i32) {
    %c0_i32 = arith.constant 0 : i32
    %c0_i32_0 = arith.constant 0 : i32
    return %arg0, %arg1, %c0_i32 : i32, i32, i32
  }
  func.func @transform_1(%arg0: i32, %arg1: i32) -> (i32, i32) {
    %c0_i32 = arith.constant 0 : i32
    %c0_i32_0 = arith.constant 0 : i32
    return %arg0, %c0_i32 : i32, i32
  }
}

</mosaic_0001>

<llo_original>
// kernel: tpu_custom_call.1
$region0: #{tpu_custom_call.1}
  #allocation0 [shape = 'u32[]', space=smem, size = 0x4, offset = 0x4, fixed_abs, tag = 'smem constant byte address 0x4 - core index']
  #allocation1 [shape = 'u32[72,128]{1,0:T(1,128)}', space=vmem, size = 0x9000, scoped, tag = 'internal scratch']
  #allocation2 [shape = 'f32[2,32]{1,0:T(2,128)}', space=vmem, size = 0x400, scoped, tag = 'scratch operand']
  %s0 = inlined_call_operand.hbm [shape: f32[2,8,32], index: 0, kind: input, shape index: {}]
  %s1 = inlined_call_operand.hbm [shape: f32[2,32], index: 1, kind: output, shape index: {}]
  %s2 = sld [smem:[#allocation0]]
  $region26: #{tpu_custom_call.1} parent=0
    _
  %s4 = ssub.s32 1, %s2
  %s5 = scalar_select 0, %s4, %s2
  $region1: #{tpu_custom_call.1} parent=0
    #allocation3 [shape = 'u8[8192]{0}', space=vmem, size = 0x2000, scoped, tag = 'input window, operand 0, single buffered']
    #allocation4 [shape = 's32[1]{0}', space=sflag, size = 0x4, scoped, tag = 'scoped memory for tpu_custom_call.1']
    #allocation5 [shape = 's32[1]{0}', space=sflag, size = 0x4, scoped, tag = 'scoped memory for tpu_custom_call.1']
    #allocation6 [shape = 'u8[1024]{0}', space=vmem, size = 0x400, scoped, tag = 'output window, operand 0, single buffered']
    %6 = vsyncpa [#allocation4], 0
    %7 = vsyncpa [#allocation5], 0
    // Predicated region
    $region2: #{tpu_custom_call.1} parent=1 // pred_check
      _
    $region3: #{tpu_custom_call.1} parent=1 // pred_check_branch
      %9 = sbr.rel (0) target = $region5
    $region4: #{tpu_custom_call.1} parent=1 // pred_region
      %11 = vsyncadd [#allocation4], 0
      %s12 = sshll.u32 %s0, 4
      %s13 = int_to_ptr.hbm [resolvable:$true] %s12
      %s14 = sshll.u32 [#allocation3], 4
      %s15 = int_to_ptr.vmem [resolvable:$true] %s14
      %20 = dma.hbm_to_vmem [thread:$0]  %s13, 256, %s15, [#allocation4], 128, 128, 8
    $region5: #{tpu_custom_call.1} parent=1 // pred_fallthru
      _
    // Predicated region
    $region6: #{tpu_custom_call.1} parent=1 // pred_check
      _
    $region7: #{tpu_custom_call.1} parent=1 // pred_check_branch
      %22 = sbr.rel (0) target = $region9
    $region8: #{tpu_custom_call.1} parent=1 // pred_region
      %24 = dma.done [#allocation4], 256
    $region9: #{tpu_custom_call.1} parent=1 // pred_fallthru
      _
    %p25 = scmp.eq.s32.totalorder 0, 0
    // Predicated region
    $region10: #{tpu_custom_call.1} parent=1 // pred_check
      %p26 = pneg %p25
    $region11: #{tpu_custom_call.1} parent=1 // pred_check_branch
      %28 = sbr.rel (%p26) target = $region13
    $region12: #{tpu_custom_call.1} parent=1 // pred_region
      %vm29 = vcmask 254976
      %30 = vst.msk [vmem:[#allocation2] sm:$0x3] %vm29, 0.0
    $region13: #{tpu_custom_call.1} parent=1 // pred_fallthru
      _
    %v31 = vld [vmem:[#allocation3] sm:$0xff]
    %v32 = vld [vmem:[#allocation3 + $0x8] sm:$0xff]
    %v33 = vld [vmem:[#allocation2] sm:$0x3]
    %vm34 = vcmask 261120
    %v35 = vsel %vm34, %v31, 0.0
    %v36 = vrot.slane %v35, 4
    %v37 = vadd.f32 %v35, %v36
    %v38 = vrot.slane %v37, 2
    %v39 = vadd.f32 %v37, %v38
    %v40 = vrot.slane %v39, 1
    %v41 = vadd.f32 %v39, %v40
    %v42 = vsel %vm34, %v32, 0.0
    %v43 = vrot.slane %v42, 4
    %v44 = vadd.f32 %v42, %v43
    %v45 = vrot.slane %v44, 2
    %v46 = vadd.f32 %v44, %v45
    %v47 = vrot.slane %v46, 1
    %v48 = vadd.f32 %v46, %v47
    %vm51 = vcmask 1041409
    %v52 = vsel %vm51, %v48, %v41
    %v54 = vadd.f32 %v33, %v52
    %vm55 = vcmask 254976
    %56 = vst.msk [vmem:[#allocation2] sm:$0x3] %vm55, %v54
    // Predicated region
    $region14: #{tpu_custom_call.1} parent=1 // pred_check
      %p57 = pneg %p25
    $region15: #{tpu_custom_call.1} parent=1 // pred_check_branch
      %59 = sbr.rel (%p57) target = $region17
    $region16: #{tpu_custom_call.1} parent=1 // pred_region
      %v60 = vld [vmem:[#allocation2] sm:$0x3]
      %v61 = vmul.f32 %v60, 0.125
      %62 = vst.msk [vmem:[#allocation6] sm:$0x3] %vm55, %v61
    $region17: #{tpu_custom_call.1} parent=1 // pred_fallthru
      _
    // Predicated region
    $region18: #{tpu_custom_call.1} parent=1 // pred_check
      _
    $region19: #{tpu_custom_call.1} parent=1 // pred_check_branch
      %64 = sbr.rel (0) target = $region21
    $region20: #{tpu_custom_call.1} parent=1 // pred_region
      %66 = vsyncadd [#allocation5], 0
      %s68 = sshll.u32 [#allocation6], 4
      %s69 = int_to_ptr.vmem [resolvable:$true] %s68
      %s70 = sshll.u32 %s1, 4
      %s71 = int_to_ptr.hbm [resolvable:$true] %s70
      %73 = dma.vmem_to_hbm [thread:$0]  %s69, 32, %s71, [#allocation5]
    $region21: #{tpu_custom_call.1} parent=1 // pred_fallthru
      _
    // Predicated region
    $region22: #{tpu_custom_call.1} parent=1 // pred_check
      _
    $region23: #{tpu_custom_call.1} parent=1 // pred_check_branch
      %75 = sbr.rel (0) target = $region25
    $region24: #{tpu_custom_call.1} parent=1 // pred_region
      %77 = dma.done [#allocation5], 32
    $region25: #{tpu_custom_call.1} parent=1 // pred_fallthru
      _
    %78 = vsyncpa [#allocation4], 1
    %79 = vsyncpa [#allocation5], 1

</llo_original>
